<compile_context>
chip_gen: v7x
topology: tpu7x:2x2x1
jax: 0.10.0
libtpu: 0.0.40
codegen_flags: <defaults>
</compile_context>

<pallas_src>
import jax
import jax.numpy as jnp
from jax.experimental import pallas as pl
from jax.experimental.pallas import tpu as pltpu

LANE = 128     # TPU lane width; gate block and output block each live in one lane row
GS = 32        # per-gate lane stride inside the 128-lane gate block (4 * 32 = 128)
B_TILE = 8     # batch tile = one f32 sublane group


def lstm_linear_kernel(x_ref, wih_ref, whh_ref, b_ref, wlin_ref, blin_ref, z_ref):
    """One batch tile: full LSTM recurrence over the sequence + final Linear.

    x_ref   : (B_TILE, seq_len)  f32  x[b, t]            (input_size == 1)
    wih_ref : (1, LANE)          f32  W_ih gate-packed on lanes (i|f|g|o at 0/32/64/96)
    whh_ref : (H, LANE)          f32  row j = gate-packed recurrent weights for h_j
    b_ref   : (1, LANE)          f32  b_ih + b_hh, gate-packed
    wlin_ref: (H, LANE)          f32  row j = output weights for h_j (lanes [0, O))
    blin_ref: (1, LANE)          f32  b_lin on lanes [0, O)
    z_ref   : (B_TILE, LANE)     f32  output, lanes [0, O) valid
    """
    batch = x_ref.shape[0]
    seq_len = x_ref.shape[1]
    hidden = whh_ref.shape[0]

    wih = wih_ref[...]           # (1, LANE)
    whh = whh_ref[...]           # (H, LANE)
    bias = b_ref[...]            # (1, LANE)

    # Hoisted input projection: independent of h, so compute every timestep's
    # x-contribution (+ bias) before entering the serial recurrence.  Pure VPU
    # broadcast multiplies; one (B_TILE, LANE) vreg per timestep.
    gates_x = [x_ref[:, t:t + 1] * wih + bias for t in range(seq_len)]

    h = jnp.zeros((batch, hidden), jnp.float32)
    c = jnp.zeros((batch, hidden), jnp.float32)

    for t in range(seq_len):
        gates = gates_x[t]
        if t > 0:  # h == 0 at t == 0; skip the recurrent term on the critical path
            for j in range(hidden):
                gates = gates + h[:, j:j + 1] * whh[j:j + 1, :]
        i_g = jax.nn.sigmoid(gates[:, 0 * GS:0 * GS + hidden])
        f_g = jax.nn.sigmoid(gates[:, 1 * GS:1 * GS + hidden])
        g_g = jnp.tanh(gates[:, 2 * GS:2 * GS + hidden])
        o_g = jax.nn.sigmoid(gates[:, 3 * GS:3 * GS + hidden])
        c = f_g * c + i_g * g_g
        h = o_g * jnp.tanh(c)

    # Final Linear: z = h @ W_lin^T + b_lin, again as per-hidden-unit broadcasts.
    z = jnp.broadcast_to(blin_ref[...], (batch, LANE))
    for j in range(hidden):
        z = z + h[:, j:j + 1] * wlin_ref[j:j + 1, :]
    z_ref[...] = z


def _pack_gate_lanes(v, hidden):
    """(4*hidden,) gate-ordered i|f|g|o -> (1, LANE), gate g at lanes [g*GS, g*GS+hidden)."""
    segs = [jnp.pad(v[g * hidden:(g + 1) * hidden], (0, GS - hidden)) for g in range(4)]
    return jnp.concatenate(segs).reshape(1, LANE).astype(jnp.float32)


def pack_params(params):
    """One-time packing of LSTM/Linear weights into lane-packed rows (not per call)."""
    W_ih, W_hh = params["W_ih"], params["W_hh"]
    b_ih, b_hh = params["b_ih"], params["b_hh"]
    W_lin, b_lin = params["W_lin"], params["b_lin"]

    four_h, input_size = W_ih.shape
    hidden = W_hh.shape[1]
    out_size = W_lin.shape[0]
    assert four_h == 4 * hidden
    assert input_size == 1, "kernel is specialized for the module's input_size == 1"
    # TODO(synk): generalize to hidden > 32 / input_size > 1 with an MXU contraction path.
    assert hidden <= GS and out_size <= LANE

    wih_r = _pack_gate_lanes(W_ih[:, 0], hidden)                                   # (1, LANE)
    whh_r = jnp.concatenate(
        [_pack_gate_lanes(W_hh[:, j], hidden) for j in range(hidden)], axis=0)     # (H, LANE)
    b_r = _pack_gate_lanes(b_ih + b_hh, hidden)                                    # (1, LANE)
    wlin_r = jnp.concatenate(
        [jnp.pad(W_lin[:, j], (0, LANE - out_size)).reshape(1, LANE)
         for j in range(hidden)], axis=0).astype(jnp.float32)                      # (H, LANE)
    blin_r = jnp.pad(b_lin, (0, LANE - out_size)).reshape(1, LANE).astype(jnp.float32)

    return {"wih": wih_r, "whh": whh_r, "b": b_r, "wlin": wlin_r, "blin": blin_r,
            "hidden": int(hidden), "out_size": int(out_size)}


def make_model_forward(packed):
    """Returns a jitted batched forward: x (B, seq_len, 1) -> z (B, output_size).

    Applying Model.forward (num_layers == 1 => no dropout) independently to each
    sequence in the batch; packed weights are baked in as constants.
    """
    out_size = packed["out_size"]
    wih, whh, b = packed["wih"], packed["whh"], packed["b"]
    wlin, blin = packed["wlin"], packed["blin"]

    @jax.jit
    def forward(x_batch):
        B, seq_len, input_size = x_batch.shape
        assert input_size == 1
        b_pad = ((B + B_TILE - 1) // B_TILE) * B_TILE
        x2d = jnp.pad(x_batch.astype(jnp.float32).reshape(B, seq_len),
                      ((0, b_pad - B), (0, 0)))

        z_pad = pl.pallas_call(
            lstm_linear_kernel,
            out_shape=jax.ShapeDtypeStruct((b_pad, LANE), jnp.float32),
            grid=(b_pad // B_TILE,),
            in_specs=[
                pl.BlockSpec((B_TILE, seq_len), lambda bt: (bt, 0)),   # x batch tile
                pl.BlockSpec(wih.shape, lambda bt: (0, 0)),
                pl.BlockSpec(whh.shape, lambda bt: (0, 0)),
                pl.BlockSpec(b.shape, lambda bt: (0, 0)),
                pl.BlockSpec(wlin.shape, lambda bt: (0, 0)),
                pl.BlockSpec(blin.shape, lambda bt: (0, 0)),
            ],
            out_specs=pl.BlockSpec((B_TILE, LANE), lambda bt: (bt, 0)),
            compiler_params=pltpu.CompilerParams(
                dimension_semantics=("parallel",)),
        )(x2d, wih, whh, b, wlin, blin)
        return z_pad[:B, :out_size]

    return forward


def reference_forward(x, params):
    """Pure-JAX reference matching torch.nn.LSTM + nn.Linear for one (seq, 1) sequence."""
    W_ih, W_hh = params["W_ih"], params["W_hh"]
    b_ih, b_hh = params["b_ih"], params["b_hh"]
    W_lin, b_lin = params["W_lin"], params["b_lin"]
    H = W_hh.shape[1]
    h = jnp.zeros((H,), jnp.float32)
    c = jnp.zeros((H,), jnp.float32)
    for t in range(x.shape[0]):
        gates = W_ih @ x[t] + b_ih + W_hh @ h + b_hh
        i = jax.nn.sigmoid(gates[0:H])
        f = jax.nn.sigmoid(gates[H:2 * H])
        g = jnp.tanh(gates[2 * H:3 * H])
        o = jax.nn.sigmoid(gates[3 * H:4 * H])
        c = f * c + i * g
        h = o * jnp.tanh(c)
    return W_lin @ h + b_lin


if __name__ == "__main__":
    input_size, hidden_size, output_size = 1, 1, 1

    # The module's dataset: 8 binary sequences of length 4; x_train = data[:, :3].
    data = jnp.array(
        [[[0], [0], [0], [0]], [[0], [0], [1], [0]], [[0], [1], [0], [1]],
         [[0], [1], [1], [1]], [[1], [0], [0], [0]], [[1], [0], [1], [0]],
         [[1], [1], [0], [1]], [[1], [1], [1], [1]]], dtype=jnp.float32)
    x_train = data[:, :3]                         # (8, 3, 1)

    key = jax.random.PRNGKey(0)
    k_ih, k_hh, k_bih, k_bhh, k_lw, k_lb = jax.random.split(key, 6)
    bound = 1.0 / (hidden_size ** 0.5)            # PyTorch default uniform init range
    params = {
        "W_ih": jax.random.uniform(k_ih, (4 * hidden_size, input_size),
                                   jnp.float32, -bound, bound),
        "W_hh": jax.random.uniform(k_hh, (4 * hidden_size, hidden_size),
                                   jnp.float32, -bound, bound),
        "b_ih": jax.random.uniform(k_bih, (4 * hidden_size,),
                                   jnp.float32, -bound, bound),
        "b_hh": jax.random.uniform(k_bhh, (4 * hidden_size,),
                                   jnp.float32, -bound, bound),
        "W_lin": jax.random.uniform(k_lw, (output_size, hidden_size),
                                    jnp.float32, -bound, bound),
        "b_lin": jax.random.uniform(k_lb, (output_size,),
                                    jnp.float32, -bound, bound),
    }

    forward = make_model_forward(pack_params(params))

    # Batched kernel call: all 8 training sequences (exactly one sublane tile) at once.
    z_all = jax.block_until_ready(forward(x_train))            # (8, 1)
    assert z_all.shape == (x_train.shape[0], output_size)

    # Per-sequence pure-JAX reference.
    z_ref = jnp.stack([reference_forward(x_train[i], params)
                       for i in range(x_train.shape[0])])
    assert jnp.allclose(z_all, z_ref, atol=1e-5, rtol=1e-4), (z_all, z_ref)

    # z = model(x_train[0]) from the original module corresponds to row 0.
    z0 = z_all[0]
    assert jnp.allclose(z0, reference_forward(x_train[0], params), atol=1e-5, rtol=1e-4)

    print("KERNEL_OK")
</pallas_src>

<mosaic_0001>
module attributes {stable_mosaic.version = 11 : i64} {
  func.func @lstm_linear_kernel(%arg0: i32, %arg1: memref<8x3xf32, #tpu.memory_space<vmem>>, %arg2: memref<1x128xf32, #tpu.memory_space<vmem>>, %arg3: memref<1x128xf32, #tpu.memory_space<vmem>>, %arg4: memref<1x128xf32, #tpu.memory_space<vmem>>, %arg5: memref<1x128xf32, #tpu.memory_space<vmem>>, %arg6: memref<1x128xf32, #tpu.memory_space<vmem>>, %arg7: memref<8x128xf32, #tpu.memory_space<vmem>>) attributes {dimension_semantics = [#tpu.dimension_semantics<parallel>], iteration_bounds = array<i64: 1>, scalar_prefetch = 0 : i64, scratch_operands = 0 : i64, tpu.core_type = #tpu.core_type<tc>, window_params = [{transform_indices = @transform_0, window_bounds = array<i64: 8, 3>}, {pipeline_mode = #tpu.pipeline_mode<synchronous>, transform_indices = @transform_1, window_bounds = array<i64: 1, 128>}, {pipeline_mode = #tpu.pipeline_mode<synchronous>, transform_indices = @transform_2, window_bounds = array<i64: 1, 128>}, {pipeline_mode = #tpu.pipeline_mode<synchronous>, transform_indices = @transform_3, window_bounds = array<i64: 1, 128>}, {pipeline_mode = #tpu.pipeline_mode<synchronous>, transform_indices = @transform_4, window_bounds = array<i64: 1, 128>}, {pipeline_mode = #tpu.pipeline_mode<synchronous>, transform_indices = @transform_5, window_bounds = array<i64: 1, 128>}, {transform_indices = @transform_6, window_bounds = array<i64: 8, 128>}]} {
    %c0 = arith.constant 0 : index
    %c0_0 = arith.constant 0 : index
    %0 = vector.load %arg2[%c0, %c0_0] : memref<1x128xf32, #tpu.memory_space<vmem>>, vector<1x128xf32>
    %c0_1 = arith.constant 0 : index
    %c0_2 = arith.constant 0 : index
    %1 = vector.load %arg3[%c0_1, %c0_2] : memref<1x128xf32, #tpu.memory_space<vmem>>, vector<1x128xf32>
    %c0_3 = arith.constant 0 : index
    %c0_4 = arith.constant 0 : index
    %2 = vector.load %arg4[%c0_3, %c0_4] : memref<1x128xf32, #tpu.memory_space<vmem>>, vector<1x128xf32>
    %c0_5 = arith.constant 0 : index
    %c0_6 = arith.constant 0 : index
    %3 = vector.load %arg1[%c0_5, %c0_6] : memref<8x3xf32, #tpu.memory_space<vmem>>, vector<8x1xf32>
    %4 = vector.broadcast %3 : vector<8x1xf32> to vector<8x128xf32>
    %5 = vector.broadcast %0 : vector<1x128xf32> to vector<8x128xf32>
    %6 = arith.mulf %4, %5 : vector<8x128xf32>
    %7 = vector.broadcast %2 : vector<1x128xf32> to vector<8x128xf32>
    %8 = arith.addf %6, %7 : vector<8x128xf32>
    %c0_7 = arith.constant 0 : index
    %c1 = arith.constant 1 : index
    %9 = vector.load %arg1[%c0_7, %c1] : memref<8x3xf32, #tpu.memory_space<vmem>>, vector<8x1xf32>
    %10 = vector.broadcast %9 : vector<8x1xf32> to vector<8x128xf32>
    %11 = vector.broadcast %0 : vector<1x128xf32> to vector<8x128xf32>
    %12 = arith.mulf %10, %11 : vector<8x128xf32>
    %13 = vector.broadcast %2 : vector<1x128xf32> to vector<8x128xf32>
    %14 = arith.addf %12, %13 : vector<8x128xf32>
    %c0_8 = arith.constant 0 : index
    %c2 = arith.constant 2 : index
    %15 = vector.load %arg1[%c0_8, %c2] : memref<8x3xf32, #tpu.memory_space<vmem>>, vector<8x1xf32>
    %16 = vector.broadcast %15 : vector<8x1xf32> to vector<8x128xf32>
    %17 = vector.broadcast %0 : vector<1x128xf32> to vector<8x128xf32>
    %18 = arith.mulf %16, %17 : vector<8x128xf32>
    %19 = vector.broadcast %2 : vector<1x128xf32> to vector<8x128xf32>
    %20 = arith.addf %18, %19 : vector<8x128xf32>
    %cst = arith.constant 0.000000e+00 : f32
    %21 = vector.broadcast %cst : f32 to vector<8x1xf32>
    %22 = vector.extract_strided_slice %8 {offsets = [0, 0], sizes = [8, 1], strides = [1, 1]} : vector<8x128xf32> to vector<8x1xf32>
    %23 = arith.negf %22 : vector<8x1xf32>
    %24 = math.exp %23 : vector<8x1xf32>
    %cst_9 = arith.constant 1.000000e+00 : f32
    %25 = vector.broadcast %cst_9 : f32 to vector<8x1xf32>
    %26 = arith.addf %25, %24 : vector<8x1xf32>
    %27 = arith.divf %25, %26 : vector<8x1xf32>
    %28 = vector.extract_strided_slice %8 {offsets = [0, 32], sizes = [8, 1], strides = [1, 1]} : vector<8x128xf32> to vector<8x1xf32>
    %29 = arith.negf %28 : vector<8x1xf32>
    %30 = math.exp %29 : vector<8x1xf32>
    %cst_10 = arith.constant 1.000000e+00 : f32
    %31 = vector.broadcast %cst_10 : f32 to vector<8x1xf32>
    %32 = arith.addf %31, %30 : vector<8x1xf32>
    %33 = arith.divf %31, %32 : vector<8x1xf32>
    %34 = vector.extract_strided_slice %8 {offsets = [0, 64], sizes = [8, 1], strides = [1, 1]} : vector<8x128xf32> to vector<8x1xf32>
    %35 = math.tanh %34 : vector<8x1xf32>
    %36 = vector.extract_strided_slice %8 {offsets = [0, 96], sizes = [8, 1], strides = [1, 1]} : vector<8x128xf32> to vector<8x1xf32>
    %37 = arith.negf %36 : vector<8x1xf32>
    %38 = math.exp %37 : vector<8x1xf32>
    %cst_11 = arith.constant 1.000000e+00 : f32
    %39 = vector.broadcast %cst_11 : f32 to vector<8x1xf32>
    %40 = arith.addf %39, %38 : vector<8x1xf32>
    %41 = arith.divf %39, %40 : vector<8x1xf32>
    %42 = arith.mulf %33, %21 : vector<8x1xf32>
    %43 = arith.mulf %27, %35 : vector<8x1xf32>
    %44 = arith.addf %42, %43 : vector<8x1xf32>
    %45 = math.tanh %44 : vector<8x1xf32>
    %46 = arith.mulf %41, %45 : vector<8x1xf32>
    %47 = vector.broadcast %46 : vector<8x1xf32> to vector<8x128xf32>
    %48 = vector.broadcast %1 : vector<1x128xf32> to vector<8x128xf32>
    %49 = arith.mulf %47, %48 : vector<8x128xf32>
    %50 = arith.addf %14, %49 : vector<8x128xf32>
    %51 = vector.extract_strided_slice %50 {offsets = [0, 0], sizes = [8, 1], strides = [1, 1]} : vector<8x128xf32> to vector<8x1xf32>
    %52 = arith.negf %51 : vector<8x1xf32>
    %53 = math.exp %52 : vector<8x1xf32>
    %cst_12 = arith.constant 1.000000e+00 : f32
    %54 = vector.broadcast %cst_12 : f32 to vector<8x1xf32>
    %55 = arith.addf %54, %53 : vector<8x1xf32>
    %56 = arith.divf %54, %55 : vector<8x1xf32>
    %57 = vector.extract_strided_slice %50 {offsets = [0, 32], sizes = [8, 1], strides = [1, 1]} : vector<8x128xf32> to vector<8x1xf32>
    %58 = arith.negf %57 : vector<8x1xf32>
    %59 = math.exp %58 : vector<8x1xf32>
    %cst_13 = arith.constant 1.000000e+00 : f32
    %60 = vector.broadcast %cst_13 : f32 to vector<8x1xf32>
    %61 = arith.addf %60, %59 : vector<8x1xf32>
    %62 = arith.divf %60, %61 : vector<8x1xf32>
    %63 = vector.extract_strided_slice %50 {offsets = [0, 64], sizes = [8, 1], strides = [1, 1]} : vector<8x128xf32> to vector<8x1xf32>
    %64 = math.tanh %63 : vector<8x1xf32>
    %65 = vector.extract_strided_slice %50 {offsets = [0, 96], sizes = [8, 1], strides = [1, 1]} : vector<8x128xf32> to vector<8x1xf32>
    %66 = arith.negf %65 : vector<8x1xf32>
    %67 = math.exp %66 : vector<8x1xf32>
    %cst_14 = arith.constant 1.000000e+00 : f32
    %68 = vector.broadcast %cst_14 : f32 to vector<8x1xf32>
    %69 = arith.addf %68, %67 : vector<8x1xf32>
    %70 = arith.divf %68, %69 : vector<8x1xf32>
    %71 = arith.mulf %62, %44 : vector<8x1xf32>
    %72 = arith.mulf %56, %64 : vector<8x1xf32>
    %73 = arith.addf %71, %72 : vector<8x1xf32>
    %74 = math.tanh %73 : vector<8x1xf32>
    %75 = arith.mulf %70, %74 : vector<8x1xf32>
    %76 = vector.broadcast %75 : vector<8x1xf32> to vector<8x128xf32>
    %77 = vector.broadcast %1 : vector<1x128xf32> to vector<8x128xf32>
    %78 = arith.mulf %76, %77 : vector<8x128xf32>
    %79 = arith.addf %20, %78 : vector<8x128xf32>
    %80 = vector.extract_strided_slice %79 {offsets = [0, 0], sizes = [8, 1], strides = [1, 1]} : vector<8x128xf32> to vector<8x1xf32>
    %81 = arith.negf %80 : vector<8x1xf32>
    %82 = math.exp %81 : vector<8x1xf32>
    %cst_15 = arith.constant 1.000000e+00 : f32
    %83 = vector.broadcast %cst_15 : f32 to vector<8x1xf32>
    %84 = arith.addf %83, %82 : vector<8x1xf32>
    %85 = arith.divf %83, %84 : vector<8x1xf32>
    %86 = vector.extract_strided_slice %79 {offsets = [0, 32], sizes = [8, 1], strides = [1, 1]} : vector<8x128xf32> to vector<8x1xf32>
    %87 = arith.negf %86 : vector<8x1xf32>
    %88 = math.exp %87 : vector<8x1xf32>
    %cst_16 = arith.constant 1.000000e+00 : f32
    %89 = vector.broadcast %cst_16 : f32 to vector<8x1xf32>
    %90 = arith.addf %89, %88 : vector<8x1xf32>
    %91 = arith.divf %89, %90 : vector<8x1xf32>
    %92 = vector.extract_strided_slice %79 {offsets = [0, 64], sizes = [8, 1], strides = [1, 1]} : vector<8x128xf32> to vector<8x1xf32>
    %93 = math.tanh %92 : vector<8x1xf32>
    %94 = vector.extract_strided_slice %79 {offsets = [0, 96], sizes = [8, 1], strides = [1, 1]} : vector<8x128xf32> to vector<8x1xf32>
    %95 = arith.negf %94 : vector<8x1xf32>
    %96 = math.exp %95 : vector<8x1xf32>
    %cst_17 = arith.constant 1.000000e+00 : f32
    %97 = vector.broadcast %cst_17 : f32 to vector<8x1xf32>
    %98 = arith.addf %97, %96 : vector<8x1xf32>
    %99 = arith.divf %97, %98 : vector<8x1xf32>
    %100 = arith.mulf %91, %73 : vector<8x1xf32>
    %101 = arith.mulf %85, %93 : vector<8x1xf32>
    %102 = arith.addf %100, %101 : vector<8x1xf32>
    %103 = math.tanh %102 : vector<8x1xf32>
    %104 = arith.mulf %99, %103 : vector<8x1xf32>
    %c0_18 = arith.constant 0 : index
    %c0_19 = arith.constant 0 : index
    %105 = vector.load %arg6[%c0_18, %c0_19] : memref<1x128xf32, #tpu.memory_space<vmem>>, vector<1x128xf32>
    %106 = vector.shape_cast %105 : vector<1x128xf32> to vector<1x128xf32>
    %107 = vector.broadcast %106 : vector<1x128xf32> to vector<8x128xf32>
    %c0_20 = arith.constant 0 : index
    %c0_21 = arith.constant 0 : index
    %108 = vector.load %arg5[%c0_20, %c0_21] : memref<1x128xf32, #tpu.memory_space<vmem>>, vector<1x128xf32>
    %109 = vector.broadcast %104 : vector<8x1xf32> to vector<8x128xf32>
    %110 = vector.broadcast %108 : vector<1x128xf32> to vector<8x128xf32>
    %111 = arith.mulf %109, %110 : vector<8x128xf32>
    %112 = arith.addf %107, %111 : vector<8x128xf32>
    %c0_22 = arith.constant 0 : index
    %c0_23 = arith.constant 0 : index
    %113 = vector.load %arg7[%c0_22, %c0_23] : memref<8x128xf32, #tpu.memory_space<vmem>>, vector<8x128xf32>
    tpu.vector_store %arg7[%c0_22, %c0_23], %112 {strides = array<i32>} : memref<8x128xf32, #tpu.memory_space<vmem>>, vector<8x128xf32>,
    return
  }
  func.func @transform_0(%arg0: i32) -> (i32, i32) {
    %c0_i32 = arith.constant 0 : i32
    %c0_i32_0 = arith.constant 0 : i32
    return %arg0, %c0_i32 : i32, i32
  }
  func.func @transform_1(%arg0: i32) -> (i32, i32) {
    %c0_i32 = arith.constant 0 : i32
    %c0_i32_0 = arith.constant 0 : i32
    %c0_i32_1 = arith.constant 0 : i32
    return %c0_i32, %c0_i32_0 : i32, i32
  }
  func.func @transform_2(%arg0: i32) -> (i32, i32) {
    %c0_i32 = arith.constant 0 : i32
    %c0_i32_0 = arith.constant 0 : i32
    %c0_i32_1 = arith.constant 0 : i32
    return %c0_i32, %c0_i32_0 : i32, i32
  }
  func.func @transform_3(%arg0: i32) -> (i32, i32) {
    %c0_i32 = arith.constant 0 : i32
    %c0_i32_0 = arith.constant 0 : i32
    %c0_i32_1 = arith.constant 0 : i32
    return %c0_i32, %c0_i32_0 : i32, i32
  }
  func.func @transform_4(%arg0: i32) -> (i32, i32) {
    %c0_i32 = arith.constant 0 : i32
    %c0_i32_0 = arith.constant 0 : i32
    %c0_i32_1 = arith.constant 0 : i32
    return %c0_i32, %c0_i32_0 : i32, i32
  }
  func.func @transform_5(%arg0: i32) -> (i32, i32) {
    %c0_i32 = arith.constant 0 : i32
    %c0_i32_0 = arith.constant 0 : i32
    %c0_i32_1 = arith.constant 0 : i32
    return %c0_i32, %c0_i32_0 : i32, i32
  }
  func.func @transform_6(%arg0: i32) -> (i32, i32) {
    %c0_i32 = arith.constant 0 : i32
    %c0_i32_0 = arith.constant 0 : i32
    return %arg0, %c0_i32 : i32, i32
  }
}

</mosaic_0001>

<llo_original>
// kernel: forward.1
$region0: #{forward.1}
  #allocation0 [shape = 'u32[]', space=smem, size = 0x4, offset = 0x4, fixed_abs, tag = 'smem constant byte address 0x4 - core index']
  #allocation1 [shape = 'u32[144,128]{1,0:T(1,128)}', space=vmem, size = 0x12000, scoped, tag = 'internal scratch']
  %s0 = inlined_call_operand.vmem [shape: f32[8,3], index: 0, kind: input, shape index: {}]
  %s1 = inlined_call_operand.vmem [shape: f32[1,128], index: 1, kind: input, shape index: {}]
  %s2 = inlined_call_operand.vmem [shape: f32[1,128], index: 2, kind: input, shape index: {}]
  %s3 = inlined_call_operand.vmem [shape: f32[1,128], index: 3, kind: input, shape index: {}]
  %s4 = inlined_call_operand.vmem [shape: f32[1,128], index: 4, kind: input, shape index: {}]
  %s5 = inlined_call_operand.vmem [shape: f32[1,128], index: 5, kind: input, shape index: {}]
  %s6 = inlined_call_operand.vmem [shape: f32[8,128], index: 6, kind: output, shape index: {}]
  %s7 = sld [smem:[#allocation0]]
  $region34: #{forward.1} parent=0
    _
  %s9 = ssub.s32 1, %s7
  %s10 = scalar_select 0, %s9, %s7
  // Predicated region
  $region2: #{forward.1} parent=0 // pred_check
    _
  $region3: #{forward.1} parent=0 // pred_check_branch
    %12 = sbr.rel (0) target = $region5
  $region4: #{forward.1} parent=0 // pred_region
    _
  $region5: #{forward.1} parent=0 // pred_fallthru
    _
  // Predicated region
  $region6: #{forward.1} parent=0 // pred_check
    _
  $region7: #{forward.1} parent=0 // pred_check_branch
    %14 = sbr.rel (0) target = $region9
  $region8: #{forward.1} parent=0 // pred_region
    _
  $region9: #{forward.1} parent=0 // pred_fallthru
    _
  // Predicated region
  $region10: #{forward.1} parent=0 // pred_check
    _
  $region11: #{forward.1} parent=0 // pred_check_branch
    %16 = sbr.rel (0) target = $region13
  $region12: #{forward.1} parent=0 // pred_region
    _
  $region13: #{forward.1} parent=0 // pred_fallthru
    _
  // Predicated region
  $region14: #{forward.1} parent=0 // pred_check
    _
  $region15: #{forward.1} parent=0 // pred_check_branch
    %18 = sbr.rel (0) target = $region17
  $region16: #{forward.1} parent=0 // pred_region
    _
  $region17: #{forward.1} parent=0 // pred_fallthru
    _
  // Predicated region
  $region18: #{forward.1} parent=0 // pred_check
    _
  $region19: #{forward.1} parent=0 // pred_check_branch
    %20 = sbr.rel (0) target = $region21
  $region20: #{forward.1} parent=0 // pred_region
    _
  $region21: #{forward.1} parent=0 // pred_fallthru
    _
  // Predicated region
  $region22: #{forward.1} parent=0 // pred_check
    _
  $region23: #{forward.1} parent=0 // pred_check_branch
    %22 = sbr.rel (0) target = $region25
  $region24: #{forward.1} parent=0 // pred_region
    _
  $region25: #{forward.1} parent=0 // pred_fallthru
    _
  %v23 = vld [vmem:[%s1] sm:$0x1]
  %v24 = vld [vmem:[%s2] sm:$0x1]
  %v25 = vld [vmem:[%s3] sm:$0x1]
  %v26 = vld [vmem:[%s0] sm:$0xff]
  %28 = vset.pattern.permute.xlu0 0
  %29 = vperm.xlu0 %28, %v26
  %v30 = vpop.permute.xlu0 %29
  %v33 = vlaneseq
  %v34 = vshrl.u32 %v33, 7
  %v35 = vsub.s32 0, %v34
  %v36 = vrot.slane %v23, %v35
  %v38 = vmul.f32 %v30, %v36
  %v40 = vlaneseq
  %v41 = vshrl.u32 %v40, 7
  %v42 = vsub.s32 0, %v41
  %v43 = vrot.slane %v25, %v42
  %v45 = vadd.f32 %v38, %v43
  %46 = vset.pattern.permute.xlu0 1
  %47 = vperm.xlu0 %46, %v26
  %v48 = vpop.permute.xlu0 %47
  %v50 = vmul.f32 %v48, %v36
  %v51 = vadd.f32 %v50, %v43
  %52 = vset.pattern.permute.xlu0 2
  %53 = vperm.xlu0 %52, %v26
  %v54 = vpop.permute.xlu0 %53
  %v56 = vmul.f32 %v54, %v36
  %v57 = vadd.f32 %v56, %v43
  %v58 = vxor.u32 %v45, 2147483648
  %v59 = vmul.f32 %v58, 1.442695
  %v60 = vpow.pop %v59
  %v61 = vadd.f32 %v60, 1.0
  %v62 = vrcp.pop %v61
  %v63 = vmul.f32 1.0, %v62
  %v64 = vtanh.pop %v45
  %v65 = vmul.f32 %v63, 0.0
  %67 = vrot.lane.b32.xlu0 %v64, 64
  %v68 = vpop.permute.xlu0 %67
  %v70 = vmul.f32 %v63, %v68
  %72 = vrot.lane.b32.xlu0 %v70, 32
  %v73 = vpop.permute.xlu0 %72
  %v75 = vadd.f32 %v65, %v73
  %v76 = vtanh.pop %v75
  %78 = vrot.lane.b32.xlu0 %v76, 64
  %v79 = vpop.permute.xlu0 %78
  %v81 = vmul.f32 %v63, %v79
  %83 = vset.pattern.permute.xlu0 96
  %84 = vperm.xlu0 %83, %v81
  %v85 = vpop.permute.xlu0 %84
  %v88 = vlaneseq
  %v89 = vshrl.u32 %v88, 7
  %v90 = vsub.s32 0, %v89
  %v91 = vrot.slane %v24, %v90
  %v93 = vmul.f32 %v85, %v91
  %v94 = vadd.f32 %v51, %v93
  %v95 = vxor.u32 %v94, 2147483648
  %v96 = vmul.f32 %v95, 1.442695
  %v97 = vpow.pop %v96
  %v98 = vadd.f32 %v97, 1.0
  %v99 = vrcp.pop %v98
  %v100 = vmul.f32 1.0, %v99
  %v101 = vtanh.pop %v94
  %v102 = vmul.f32 %v100, %v75
  %104 = vrot.lane.b32.xlu0 %v101, 64
  %v105 = vpop.permute.xlu0 %104
  %v107 = vmul.f32 %v100, %v105
  %109 = vrot.lane.b32.xlu0 %v107, 32
  %v110 = vpop.permute.xlu0 %109
  %v112 = vadd.f32 %v102, %v110
  %v113 = vtanh.pop %v112
  %115 = vrot.lane.b32.xlu0 %v113, 64
  %v116 = vpop.permute.xlu0 %115
  %v118 = vmul.f32 %v100, %v116
  %120 = vset.pattern.permute.xlu0 96
  %121 = vperm.xlu0 %120, %v118
  %v122 = vpop.permute.xlu0 %121
  %v124 = vmul.f32 %v122, %v91
  %v125 = vadd.f32 %v57, %v124
  %v126 = vxor.u32 %v125, 2147483648
  %v127 = vmul.f32 %v126, 1.442695
  %v128 = vpow.pop %v127
  %v129 = vadd.f32 %v128, 1.0
  %v130 = vrcp.pop %v129
  %v131 = vmul.f32 1.0, %v130
  %v132 = vtanh.pop %v125
  %v133 = vmul.f32 %v131, %v112
  %135 = vrot.lane.b32.xlu0 %v132, 64
  %v136 = vpop.permute.xlu0 %135
  %v138 = vmul.f32 %v131, %v136
  %140 = vrot.lane.b32.xlu0 %v138, 32
  %v141 = vpop.permute.xlu0 %140
  %v143 = vadd.f32 %v133, %v141
  %v144 = vtanh.pop %v143
  %146 = vrot.lane.b32.xlu0 %v144, 64
  %v147 = vpop.permute.xlu0 %146
  %v149 = vmul.f32 %v131, %v147
  %v150 = vld [vmem:[%s5] sm:$0x1]
  %v152 = vlaneseq
  %v153 = vshrl.u32 %v152, 7
  %v154 = vsub.s32 0, %v153
  %v155 = vrot.slane %v150, %v154
  %v157 = vld [vmem:[%s4] sm:$0x1]
  %159 = vset.pattern.permute.xlu0 96
  %160 = vperm.xlu0 %159, %v149
  %v161 = vpop.permute.xlu0 %160
  %v164 = vlaneseq
  %v165 = vshrl.u32 %v164, 7
  %v166 = vsub.s32 0, %v165
  %v167 = vrot.slane %v157, %v166
  %v169 = vmul.f32 %v161, %v167
  %v170 = vadd.f32 %v155, %v169
  %171 = vst [vmem:[%s6] sm:$0xff] %v170
  // Predicated region
  $region26: #{forward.1} parent=0 // pred_check
    _
  $region27: #{forward.1} parent=0 // pred_check_branch
    %173 = sbr.rel (0) target = $region29
  $region28: #{forward.1} parent=0 // pred_region
    _
  $region29: #{forward.1} parent=0 // pred_fallthru
    _
  // Predicated region
  $region30: #{forward.1} parent=0 // pred_check
    _
  $region31: #{forward.1} parent=0 // pred_check_branch
    %175 = sbr.rel (0) target = $region33
  $region32: #{forward.1} parent=0 // pred_region
    _
  $region33: #{forward.1} parent=0 // pred_fallthru
    _

</llo_original>
